<compile_context>
chip_gen: v6e
topology: v6e:2x2x1
jax: 0.10.0
libtpu: 0.0.40
codegen_flags: <defaults>
</compile_context>

<pallas_src>
import functools

import jax
import jax.numpy as jnp
from jax.experimental import pallas as pl
from jax.experimental.pallas import tpu as pltpu

MOMENTUM = 0.9
TARGET_BLOCK_BYTES = 8 << 20          # ~8 MiB x-block per grid step
VMEM_LIMIT_BYTES = 32 * 1024 * 1024   # safe on v5e/v6e/v7x


def _bn_sum_kernel(x_ref, sum_ref, sq_ref, *, hw_valid, hw_tile, need_mask):
    """Streamed per-channel sum / sum-of-squares.

    x_ref   : VMEM (n_tile, C_work, hw_tile) slab of x
    sum_ref : VMEM (C_work, 1) f32 output, resident across the whole grid
    sq_ref  : VMEM (C_work, 1) f32 output, resident across the whole grid
    """
    n = pl.program_id(0)
    t = pl.program_id(1)

    @pl.when((n == 0) & (t == 0))
    def _init():
        sum_ref[...] = jnp.zeros_like(sum_ref)
        sq_ref[...] = jnp.zeros_like(sq_ref)

    x = x_ref[...].astype(jnp.float32)                    # (n_tile, C_work, hw_tile)

    if need_mask:
        # Tail block of a cdiv spatial grid: zero out lanes past the real extent.
        lane = jax.lax.broadcasted_iota(jnp.int32, x.shape, dimension=2)
        pos = t * hw_tile + lane
        x = jnp.where(pos < hw_valid, x, 0.0)

    s0 = jnp.sum(x, axis=0)                               # (C_work, hw_tile)  VALU
    q0 = jnp.sum(x * x, axis=0)                           # (C_work, hw_tile)  VALU
    sum_ref[...] += jnp.sum(s0, axis=-1, keepdims=True)   # (C_work, 1)        XLU
    sq_ref[...] += jnp.sum(q0, axis=-1, keepdims=True)    # (C_work, 1)        XLU


def _choose_fold(C, HW, itemsize):
    """Fold a factor k of HW into the channel axis so C*k fills the sublane tile
    (8 rows for 32-bit, 16 for bf16, ...). Requires k | HW; free in HBM."""
    rows_per_tile = 8 * max(1, 4 // itemsize)
    if C >= rows_per_tile:
        return 1
    k = max(1, rows_per_tile // C)
    while k > 1 and HW % k != 0:
        k -= 1
    return k


def _choose_tiles(N, C_work, HW_work, itemsize, target_bytes):
    """Pick (n_tile, hw_tile) so one block is as close to `target_bytes` as
    possible while staying layout-legal and VMEM-safe."""
    img_bytes = C_work * HW_work * itemsize
    if img_bytes <= target_bytes:
        # Whole image(s) per step: last dim = full extent (always legal),
        # fold as many batch elements as fit the target.
        hw_tile = HW_work
        n_cap = max(1, min(N, target_bytes // max(1, img_bytes)))
        n_tile = 1
        for d in range(n_cap, 0, -1):
            if N % d == 0:
                n_tile = d
                break
        return n_tile, hw_tile
    # Single image larger than target: tile spatial axis in 128-lane multiples.
    cap = max(128, (target_bytes // max(1, C_work * itemsize)) // 128 * 128)
    hw_tile = min(cap, pl.cdiv(HW_work, 128) * 128)
    return 1, hw_tile


def bn_statistics_pallas(x_nchw, running_mean, running_var, is_first_batch,
                         momentum=MOMENTUM):
    """Functional equivalent of BNStatistics.forward.

    Returns (x_nchw, new_running_mean, new_running_var); x is passed through
    untouched (no extra HBM traffic for it).
    """
    N, C, H, W = x_nchw.shape
    HW = H * W
    itemsize = jnp.dtype(x_nchw.dtype).itemsize

    # Sublane fold + tile selection.
    k = _choose_fold(C, HW, itemsize)
    C_work, HW_work = C * k, HW // k
    x3 = x_nchw.reshape(N, C_work, HW_work)        # contiguous view, no transpose

    n_tile, hw_tile = _choose_tiles(N, C_work, HW_work, itemsize,
                                    TARGET_BLOCK_BYTES)
    grid = (N // n_tile, pl.cdiv(HW_work, hw_tile))
    need_mask = grid[1] * hw_tile != HW_work

    kernel = functools.partial(_bn_sum_kernel, hw_valid=HW_work,
                               hw_tile=hw_tile, need_mask=need_mask)

    cost = pl.CostEstimate(
        flops=3 * x_nchw.size,               # 1 mul + 2 adds per element (approx)
        transcendentals=0,
        bytes_accessed=x_nchw.size * itemsize + 2 * C_work * 4,
    )

    sums, sqs = pl.pallas_call(
        kernel,
        out_shape=(
            jax.ShapeDtypeStruct((C_work, 1), jnp.float32),
            jax.ShapeDtypeStruct((C_work, 1), jnp.float32),
        ),
        grid=grid,
        in_specs=[
            pl.BlockSpec((n_tile, C_work, hw_tile), lambda n, t: (n, 0, t)),
        ],
        out_specs=(
            pl.BlockSpec((C_work, 1), lambda n, t: (0, 0)),
            pl.BlockSpec((C_work, 1), lambda n, t: (0, 0)),
        ),
        compiler_params=pltpu.CompilerParams(
            dimension_semantics=("arbitrary", "arbitrary"),
            vmem_limit_bytes=VMEM_LIMIT_BYTES,
        ),
        cost_estimate=cost,
    )(x3)

    # Finalize (O(C) work) in XLA: un-fold channels, mean/var, momentum blend.
    count = float(N * HW)
    sum_c = jnp.sum(sums.reshape(C, k), axis=1)
    sq_c = jnp.sum(sqs.reshape(C, k), axis=1)
    mean = sum_c / count
    var = jnp.maximum(sq_c / count - mean * mean, 0.0)   # guard cancellation
    mean = mean.reshape(1, C, 1, 1)
    var = var.reshape(1, C, 1, 1)

    rm = running_mean.astype(jnp.float32).reshape(1, C, 1, 1)
    rv = running_var.astype(jnp.float32).reshape(1, C, 1, 1)
    if is_first_batch:
        new_rm, new_rv = mean, var
    else:
        new_rm = momentum * rm + (1.0 - momentum) * mean
        new_rv = momentum * rv + (1.0 - momentum) * var
    return x_nchw, new_rm, new_rv


class BNStatisticsPallas:
    """Stateful wrapper mirroring the PyTorch module's buffer semantics."""

    def __init__(self, num_features):
        shape = (1, num_features, 1, 1)
        self.running_mean = jnp.zeros(shape, jnp.float32)
        self.running_var = jnp.zeros(shape, jnp.float32)
        self.is_first_batch = True

    def __call__(self, x):
        x, self.running_mean, self.running_var = bn_statistics_pallas(
            x, self.running_mean, self.running_var, self.is_first_batch
        )
        self.is_first_batch = False
        return x


def _reference(x, rm, rv, is_first):
    mean = jnp.mean(x, axis=(0, 2, 3), keepdims=True)
    var = jnp.mean((x - mean) ** 2, axis=(0, 2, 3), keepdims=True)
    if is_first:
        return mean, var
    return (MOMENTUM * rm + (1.0 - MOMENTUM) * mean,
            MOMENTUM * rv + (1.0 - MOMENTUM) * var)


if __name__ == "__main__":
    key = jax.random.PRNGKey(0)
    k1, k2 = jax.random.split(key)
    N, C, H, W = 2, 4, 16, 16

    x1 = jax.random.normal(k1, (N, C, H, W), dtype=jnp.float32) * 2.0 + 0.5
    x2 = jax.random.normal(k2, (N, C, H, W), dtype=jnp.float32) * 0.7 - 1.0

    mod = BNStatisticsPallas(C)

    # First batch (is_first path)
    rm0, rv0 = mod.running_mean, mod.running_var
    out1 = mod(x1)
    jax.block_until_ready((out1, mod.running_mean, mod.running_var))
    ref_rm1, ref_rv1 = _reference(x1, rm0, rv0, True)

    # Second batch (momentum path)
    out2 = mod(x2)
    jax.block_until_ready((out2, mod.running_mean, mod.running_var))
    ref_rm2, ref_rv2 = _reference(x2, ref_rm1, ref_rv1, False)

    assert out1.shape == x1.shape and out2.shape == x2.shape
    assert jnp.allclose(out1, x1) and jnp.allclose(out2, x2)          # identity on x
    assert jnp.allclose(mod.running_mean, ref_rm1 * 0 + ref_rm2, atol=1e-5, rtol=1e-5)
    assert jnp.allclose(mod.running_var, ref_rv2, atol=1e-5, rtol=1e-5)

    print("KERNEL_OK")
</pallas_src>

<mosaic_0001>
module attributes {stable_mosaic.version = 11 : i64} {
  func.func @_bn_sum_kernel(%arg0: i32, %arg1: i32, %arg2: memref<2x8x128xf32, #tpu.memory_space<vmem>>, %arg3: memref<8x1xf32, #tpu.memory_space<vmem>>, %arg4: memref<8x1xf32, #tpu.memory_space<vmem>>) attributes {dimension_semantics = [#tpu.dimension_semantics<arbitrary>, #tpu.dimension_semantics<arbitrary>], iteration_bounds = array<i64: 1, 1>, scalar_prefetch = 0 : i64, scratch_operands = 0 : i64, tpu.core_type = #tpu.core_type<tc>, window_params = [{transform_indices = @transform_0, window_bounds = array<i64: 2, 8, 128>}, {pipeline_mode = #tpu.pipeline_mode<synchronous>, transform_indices = @transform_1, window_bounds = array<i64: 8, 1>}, {pipeline_mode = #tpu.pipeline_mode<synchronous>, transform_indices = @transform_2, window_bounds = array<i64: 8, 1>}]} {
    %c0_i32 = arith.constant 0 : i32
    %0 = arith.cmpi eq, %arg0, %c0_i32 : i32
    %c0_i32_0 = arith.constant 0 : i32
    %1 = arith.cmpi eq, %arg1, %c0_i32_0 : i32
    %2 = arith.andi %0, %1 : i1
    %3 = arith.extui %2 : i1 to i32
    %c0_i32_1 = arith.constant 0 : i32
    %4 = arith.cmpi ne, %3, %c0_i32_1 : i32
    scf.if %4 {
      %cst_15 = arith.constant 0.000000e+00 : f32
      %19 = vector.broadcast %cst_15 : f32 to vector<8x1xf32>
      %c0_16 = arith.constant 0 : index
      %c0_17 = arith.constant 0 : index
      %20 = vector.load %arg3[%c0_16, %c0_17] : memref<8x1xf32, #tpu.memory_space<vmem>>, vector<8x1xf32>
      tpu.vector_store %arg3[%c0_16, %c0_17], %19 {strides = array<i32>} : memref<8x1xf32, #tpu.memory_space<vmem>>, vector<8x1xf32>,
      %cst_18 = arith.constant 0.000000e+00 : f32
      %21 = vector.broadcast %cst_18 : f32 to vector<8x1xf32>
      %c0_19 = arith.constant 0 : index
      %c0_20 = arith.constant 0 : index
      %22 = vector.load %arg4[%c0_19, %c0_20] : memref<8x1xf32, #tpu.memory_space<vmem>>, vector<8x1xf32>
      tpu.vector_store %arg4[%c0_19, %c0_20], %21 {strides = array<i32>} : memref<8x1xf32, #tpu.memory_space<vmem>>, vector<8x1xf32>,
    } else {
    }
    %c0 = arith.constant 0 : index
    %c0_2 = arith.constant 0 : index
    %c0_3 = arith.constant 0 : index
    %5 = vector.load %arg2[%c0, %c0_2, %c0_3] : memref<2x8x128xf32, #tpu.memory_space<vmem>>, vector<2x8x128xf32>
    %cst = arith.constant dense<0.000000e+00> : vector<8x128xf32>
    %6 = vector.multi_reduction <add>, %5, %cst [0] : vector<2x8x128xf32> to vector<8x128xf32>
    %7 = arith.mulf %5, %5 : vector<2x8x128xf32>
    %cst_4 = arith.constant dense<0.000000e+00> : vector<8x128xf32>
    %8 = vector.multi_reduction <add>, %7, %cst_4 [0] : vector<2x8x128xf32> to vector<8x128xf32>
    %c0_5 = arith.constant 0 : index
    %c0_6 = arith.constant 0 : index
    %9 = vector.load %arg3[%c0_5, %c0_6] : memref<8x1xf32, #tpu.memory_space<vmem>>, vector<8x1xf32>
    %cst_7 = arith.constant dense<0.000000e+00> : vector<8xf32>
    %10 = vector.multi_reduction <add>, %6, %cst_7 [1] : vector<8x128xf32> to vector<8xf32>
    %11 = vector.shape_cast %10 : vector<8xf32> to vector<8x1xf32>
    %12 = arith.addf %9, %11 : vector<8x1xf32>
    %c0_8 = arith.constant 0 : index
    %c0_9 = arith.constant 0 : index
    %13 = vector.load %arg3[%c0_8, %c0_9] : memref<8x1xf32, #tpu.memory_space<vmem>>, vector<8x1xf32>
    tpu.vector_store %arg3[%c0_8, %c0_9], %12 {strides = array<i32>} : memref<8x1xf32, #tpu.memory_space<vmem>>, vector<8x1xf32>,
    %c0_10 = arith.constant 0 : index
    %c0_11 = arith.constant 0 : index
    %14 = vector.load %arg4[%c0_10, %c0_11] : memref<8x1xf32, #tpu.memory_space<vmem>>, vector<8x1xf32>
    %cst_12 = arith.constant dense<0.000000e+00> : vector<8xf32>
    %15 = vector.multi_reduction <add>, %8, %cst_12 [1] : vector<8x128xf32> to vector<8xf32>
    %16 = vector.shape_cast %15 : vector<8xf32> to vector<8x1xf32>
    %17 = arith.addf %14, %16 : vector<8x1xf32>
    %c0_13 = arith.constant 0 : index
    %c0_14 = arith.constant 0 : index
    %18 = vector.load %arg4[%c0_13, %c0_14] : memref<8x1xf32, #tpu.memory_space<vmem>>, vector<8x1xf32>
    tpu.vector_store %arg4[%c0_13, %c0_14], %17 {strides = array<i32>} : memref<8x1xf32, #tpu.memory_space<vmem>>, vector<8x1xf32>,
    return
  }
  func.func @transform_0(%arg0: i32, %arg1: i32) -> (i32, i32, i32) {
    %c0_i32 = arith.constant 0 : i32
    %c0_i32_0 = arith.constant 0 : i32
    return %arg0, %c0_i32, %arg1 : i32, i32, i32
  }
  func.func @transform_1(%arg0: i32, %arg1: i32) -> (i32, i32) {
    %c0_i32 = arith.constant 0 : i32
    %c0_i32_0 = arith.constant 0 : i32
    %c0_i32_1 = arith.constant 0 : i32
    return %c0_i32, %c0_i32_0 : i32, i32
  }
  func.func @transform_2(%arg0: i32, %arg1: i32) -> (i32, i32) {
    %c0_i32 = arith.constant 0 : i32
    %c0_i32_0 = arith.constant 0 : i32
    %c0_i32_1 = arith.constant 0 : i32
    return %c0_i32, %c0_i32_0 : i32, i32
  }
}

</mosaic_0001>

<llo_original>
// kernel: tpu_custom_call.1
$region0: #{tpu_custom_call.1}
  #allocation0 [shape = 'u32[]', space=smem, size = 0x4, offset = 0x4, fixed_abs, tag = 'smem constant byte address 0x4 - core index']
  #allocation1 [shape = 'u32[144,128]{1,0:T(1,128)}', space=vmem, size = 0x12000, scoped, tag = 'internal scratch']
  %s0 = inlined_call_operand.hbm [shape: f32[2,8,128], index: 0, kind: input, shape index: {}]
  %s1 = inlined_call_operand.vmem [shape: f32[8,1], index: 1, kind: output, shape index: {0}]
  %s2 = inlined_call_operand.vmem [shape: f32[8,1], index: 2, kind: output, shape index: {1}]
  %3 = xla_tuple %s1, %s2
  %s4 = sld [smem:[#allocation0]]
  $region30: #{tpu_custom_call.1} parent=0
    _
  %s6 = ssub.s32 1, %s4
  %s7 = scalar_select 0, %s6, %s4
  $region1: #{tpu_custom_call.1} parent=0
    #allocation2 [shape = 'u8[8192]{0}', space=vmem, size = 0x2000, scoped, tag = 'input window, operand 0, single buffered']
    #allocation3 [shape = 's32[1]{0}', space=sflag, size = 0x4, scoped, tag = 'scoped memory for tpu_custom_call.1']
    %8 = vsyncpa [#allocation3], 0
    // Predicated region
    $region2: #{tpu_custom_call.1} parent=1 // pred_check
      _
    $region3: #{tpu_custom_call.1} parent=1 // pred_check_branch
      %10 = sbr.rel (0) target = $region5
    $region4: #{tpu_custom_call.1} parent=1 // pred_region
      %s12 = ssub.s32 256, 256
      %13 = vsyncadd [#allocation3], %s12
      %s14 = sshll.u32 [#allocation2], 4
      %s15 = int_to_ptr.vmem [resolvable:$true] %s14
      %20 = dma.hbm_to_vmem [thread:$0]  %s0, 256, %s15, [#allocation3], 128, 128, 8
    $region5: #{tpu_custom_call.1} parent=1 // pred_fallthru
      _
    // Predicated region
    $region6: #{tpu_custom_call.1} parent=1 // pred_check
      _
    $region7: #{tpu_custom_call.1} parent=1 // pred_check_branch
      %22 = sbr.rel (0) target = $region9
    $region8: #{tpu_custom_call.1} parent=1 // pred_region
      %23 = dma.done [#allocation3], 256
    $region9: #{tpu_custom_call.1} parent=1 // pred_fallthru
      _
    %p24 = scmp.eq.s32.totalorder 0, 0
    %p25 = scmp.eq.s32.totalorder 0, 0
    %p26 = pnand %p24, %p25
    %p27 = pneg %p26
    // Predicated region
    $region10: #{tpu_custom_call.1} parent=1 // pred_check
      _
    $region11: #{tpu_custom_call.1} parent=1 // pred_check_branch
      %29 = sbr.rel (%p26) target = $region13
    $region12: #{tpu_custom_call.1} parent=1 // pred_region
      %vm30 = vcmask 7168
      %31 = vst.msk [vmem:[%s1] sm:$0xff] %vm30, 0.0
      %32 = vst.msk [vmem:[%s2] sm:$0xff] %vm30, 0.0
    $region13: #{tpu_custom_call.1} parent=1 // pred_fallthru
      _
    %v33 = vld [vmem:[#allocation2] sm:$0xff]
    %v34 = vld [vmem:[#allocation2 + $0x8] sm:$0xff]
    %v35 = vadd.f32 %v33, %v34
    %v36 = vmul.f32 %v33, %v33
    %v37 = vmul.f32 %v34, %v34
    %v38 = vadd.f32 %v36, %v37
    %v39 = vld [vmem:[%s1] sm:$0xff]
    %40 = vadd.xlane.f32.xlu0 %v35
    %v41 = vpop.xlane.xlu0 %40
    %v42 = vadd.f32 %v39, %v41
    %vm43 = vcmask 7168
    %44 = vst.msk [vmem:[%s1] sm:$0xff] %vm43, %v42
    %v45 = vld [vmem:[%s2] sm:$0xff]
    %46 = vadd.xlane.f32.xlu0 %v38
    %v47 = vpop.xlane.xlu0 %46
    %v48 = vadd.f32 %v45, %v47
    %49 = vst.msk [vmem:[%s2] sm:$0xff] %vm43, %v48
    // Predicated region
    $region14: #{tpu_custom_call.1} parent=1 // pred_check
      _
    $region15: #{tpu_custom_call.1} parent=1 // pred_check_branch
      %51 = sbr.rel (0) target = $region17
    $region16: #{tpu_custom_call.1} parent=1 // pred_region
      _
    $region17: #{tpu_custom_call.1} parent=1 // pred_fallthru
      _
    // Predicated region
    $region18: #{tpu_custom_call.1} parent=1 // pred_check
      _
    $region19: #{tpu_custom_call.1} parent=1 // pred_check_branch
      %53 = sbr.rel (0) target = $region21
    $region20: #{tpu_custom_call.1} parent=1 // pred_region
      _
    $region21: #{tpu_custom_call.1} parent=1 // pred_fallthru
      _
    // Predicated region
    $region22: #{tpu_custom_call.1} parent=1 // pred_check
      _
    $region23: #{tpu_custom_call.1} parent=1 // pred_check_branch
      %55 = sbr.rel (0) target = $region25
    $region24: #{tpu_custom_call.1} parent=1 // pred_region
      _
    $region25: #{tpu_custom_call.1} parent=1 // pred_fallthru
      _
    // Predicated region
    $region26: #{tpu_custom_call.1} parent=1 // pred_check
      _
    $region27: #{tpu_custom_call.1} parent=1 // pred_check_branch
      %57 = sbr.rel (0) target = $region29
    $region28: #{tpu_custom_call.1} parent=1 // pred_region
      _
    $region29: #{tpu_custom_call.1} parent=1 // pred_fallthru
      _
    %58 = vsyncpa [#allocation3], 1

</llo_original>
